<compile_context>
chip_gen: v7x
topology: tpu7x:2x2x1
jax: 0.10.0
libtpu: 0.0.40
codegen_flags: <defaults>
</compile_context>

<pallas_src>
import jax
import jax.numpy as jnp
from jax.experimental import pallas as pl
from jax.experimental.pallas import tpu as pltpu


def _sigmoid_eup(x):
    # exp and the approximate reciprocal both map to the EUP slot.
    return pl.reciprocal(1.0 + jnp.exp(-x), approx=True)


def classifier_fwd_kernel(x_ref, w_ih_ref, w_ho_ref, out_ref):
    # x_ref:    (B, inodes)
    # w_ih_ref: (hnodes, inodes)
    # w_ho_ref: (onodes, hnodes)
    # out_ref:  (B, onodes)
    x = x_ref[...]
    w_ih = w_ih_ref[...]
    w_ho = w_ho_ref[...]

    # hidden_inputs = x @ W_ih^T, expressed as a dim-1/dim-1 contraction
    # (no in-kernel transpose / XLU relayout of the weight tile).
    hidden_in = jax.lax.dot_general(
        x, w_ih,
        dimension_numbers=(((1,), (1,)), ((), ())),
        preferred_element_type=jnp.float32,
    )
    hidden_out = _sigmoid_eup(hidden_in)

    # final_inputs = hidden_outputs @ W_ho^T
    final_in = jax.lax.dot_general(
        hidden_out, w_ho,
        dimension_numbers=(((1,), (1,)), ((), ())),
        preferred_element_type=jnp.float32,
    )
    out_ref[...] = _sigmoid_eup(final_in).astype(out_ref.dtype)


def classifier_forward(x, w_ih, w_ho):
    """x: (B, inodes), w_ih: (hnodes, inodes), w_ho: (onodes, hnodes)."""
    batch, inodes = x.shape
    hnodes, in2 = w_ih.shape
    onodes, hn2 = w_ho.shape
    assert in2 == inodes and hn2 == hnodes

    # Everything fits comfortably in VMEM (a few KiB): gridless single-shot
    # call with whole-array VMEM blocks — no grid-step / double-buffer overhead.
    vmem = pltpu.MemorySpace.VMEM
    return pl.pallas_call(
        classifier_fwd_kernel,
        out_shape=jax.ShapeDtypeStruct((batch, onodes), jnp.float32),
        in_specs=[
            pl.BlockSpec(memory_space=vmem),
            pl.BlockSpec(memory_space=vmem),
            pl.BlockSpec(memory_space=vmem),
        ],
        out_specs=pl.BlockSpec(memory_space=vmem),
    )(x, w_ih, w_ho)


def reference_forward(x, w_ih, w_ho):
    h = jax.nn.sigmoid(x @ w_ih.T)
    return jax.nn.sigmoid(h @ w_ho.T)


if __name__ == "__main__":
    # Shapes implied by the module's forward: a single flattened input row.
    inodes, hnodes, onodes = 64, 32, 16

    key = jax.random.PRNGKey(0)
    k_x, k_ih, k_ho = jax.random.split(key, 3)

    # Deterministic parameter init (mimics nn.Linear's uniform(-1/sqrt(fan_in), ...)).
    bound_ih = 1.0 / jnp.sqrt(inodes)
    bound_ho = 1.0 / jnp.sqrt(hnodes)
    w_ih = jax.random.uniform(
        k_ih, (hnodes, inodes), jnp.float32, minval=-bound_ih, maxval=bound_ih
    )
    w_ho = jax.random.uniform(
        k_ho, (onodes, hnodes), jnp.float32, minval=-bound_ho, maxval=bound_ho
    )

    # inputs_list viewed as (1, inodes)
    x = jax.random.uniform(k_x, (1, inodes), jnp.float32)

    out = classifier_forward(x, w_ih, w_ho)
    out = jax.block_until_ready(out)

    ref = reference_forward(x, w_ih, w_ho)
    assert out.shape == (1, onodes)
    # Slightly relaxed tolerance: sigmoid uses the EUP approximate reciprocal.
    assert jnp.allclose(out, ref, atol=5e-3, rtol=0.0), (
        f"max abs err {jnp.max(jnp.abs(out - ref))}"
    )

    print("KERNEL_OK")
</pallas_src>

<mosaic_0001>
module attributes {stable_mosaic.version = 11 : i64} {
  func.func @classifier_fwd_kernel(%arg0: memref<1x64xf32, #tpu.memory_space<vmem>>, %arg1: memref<32x64xf32, #tpu.memory_space<vmem>>, %arg2: memref<16x32xf32, #tpu.memory_space<vmem>>, %arg3: memref<1x16xf32, #tpu.memory_space<vmem>>) attributes {dimension_semantics = [], scalar_prefetch = 0 : i64, scratch_operands = 0 : i64, tpu.core_type = #tpu.core_type<tc>} {
    %c0 = arith.constant 0 : index
    %c0_0 = arith.constant 0 : index
    %0 = vector.load %arg0[%c0, %c0_0] : memref<1x64xf32, #tpu.memory_space<vmem>>, vector<1x64xf32>
    %c0_1 = arith.constant 0 : index
    %c0_2 = arith.constant 0 : index
    %1 = vector.load %arg1[%c0_1, %c0_2] : memref<32x64xf32, #tpu.memory_space<vmem>>, vector<32x64xf32>
    %c0_3 = arith.constant 0 : index
    %c0_4 = arith.constant 0 : index
    %2 = vector.load %arg2[%c0_3, %c0_4] : memref<16x32xf32, #tpu.memory_space<vmem>>, vector<16x32xf32>
    %cst = arith.constant dense<0.000000e+00> : vector<1x32xf32>
    %3 = tpu.matmul %0, %1, %cst {dimension_numbers = #tpu.dot_dimension_numbers<[1], [1], [0], [0], [0, 0, 1, 0], [], []>} : vector<1x64xf32>, vector<32x64xf32>, vector<1x32xf32> -> vector<1x32xf32>
    %cst_5 = arith.constant 0.000000e+00 : f32
    %4 = vector.broadcast %cst_5 : f32 to vector<1x32xf32>
    %5 = arith.subf %4, %3 : vector<1x32xf32>
    %6 = math.exp %5 : vector<1x32xf32>
    %cst_6 = arith.constant 1.000000e+00 : f32
    %7 = vector.broadcast %cst_6 : f32 to vector<1x32xf32>
    %8 = arith.addf %7, %6 : vector<1x32xf32>
    %9 = tpu.reciprocal %8 {approx = true} : vector<1x32xf32> -> vector<1x32xf32>
    %cst_7 = arith.constant dense<0.000000e+00> : vector<1x16xf32>
    %10 = tpu.matmul %9, %2, %cst_7 {dimension_numbers = #tpu.dot_dimension_numbers<[1], [1], [0], [0], [0, 0, 1, 0], [], []>} : vector<1x32xf32>, vector<16x32xf32>, vector<1x16xf32> -> vector<1x16xf32>
    %cst_8 = arith.constant 0.000000e+00 : f32
    %11 = vector.broadcast %cst_8 : f32 to vector<1x16xf32>
    %12 = arith.subf %11, %10 : vector<1x16xf32>
    %13 = math.exp %12 : vector<1x16xf32>
    %cst_9 = arith.constant 1.000000e+00 : f32
    %14 = vector.broadcast %cst_9 : f32 to vector<1x16xf32>
    %15 = arith.addf %14, %13 : vector<1x16xf32>
    %16 = tpu.reciprocal %15 {approx = true} : vector<1x16xf32> -> vector<1x16xf32>
    %c0_10 = arith.constant 0 : index
    %c0_11 = arith.constant 0 : index
    %17 = vector.load %arg3[%c0_10, %c0_11] : memref<1x16xf32, #tpu.memory_space<vmem>>, vector<1x16xf32>
    tpu.vector_store %arg3[%c0_10, %c0_11], %16 {strides = array<i32>} : memref<1x16xf32, #tpu.memory_space<vmem>>, vector<1x16xf32>,
    return
  }
}

</mosaic_0001>

<llo_original>
// kernel: tpu_custom_call.1
$region0: #{tpu_custom_call.1}
  #allocation0 [shape = 'u32[]', space=smem, size = 0x4, offset = 0x4, fixed_abs, tag = 'smem constant byte address 0x4 - core index']
  #allocation1 [shape = 'u32[144,128]{1,0:T(1,128)}', space=vmem, size = 0x12000, scoped, tag = 'internal scratch']
  %s0 = inlined_call_operand.hbm [shape: f32[1,64], index: 0, kind: input, shape index: {}]
  %s1 = inlined_call_operand.hbm [shape: f32[32,64], index: 1, kind: input, shape index: {}]
  %s2 = inlined_call_operand.hbm [shape: f32[16,32], index: 2, kind: input, shape index: {}]
  %s3 = inlined_call_operand.hbm [shape: f32[1,16], index: 3, kind: output, shape index: {}]
  %s4 = sld [smem:[#allocation0]]
  $region34: #{tpu_custom_call.1} parent=0
    _
  %s6 = ssub.s32 1, %s4
  %s7 = scalar_select 0, %s6, %s4
  $region1: #{tpu_custom_call.1} parent=0
    #allocation2 [shape = 'u8[512]{0}', space=vmem, size = 0x400, scoped, tag = 'input window, operand 0, single buffered']
    #allocation3 [shape = 's32[1]{0}', space=sflag, size = 0x4, scoped, tag = 'scoped memory for tpu_custom_call.1']
    #allocation4 [shape = 's32[1]{0}', space=sflag, size = 0x4, scoped, tag = 'scoped memory for tpu_custom_call.1']
    #allocation5 [shape = 'u8[16384]{0}', space=vmem, size = 0x4000, scoped, tag = 'input window, operand 1, single buffered']
    #allocation6 [shape = 's32[1]{0}', space=sflag, size = 0x4, scoped, tag = 'scoped memory for tpu_custom_call.1']
    #allocation7 [shape = 'u8[8192]{0}', space=vmem, size = 0x2000, scoped, tag = 'input window, operand 2, single buffered']
    #allocation8 [shape = 'u8[512]{0}', space=vmem, size = 0x400, scoped, tag = 'output window, operand 0, single buffered']
    %8 = vsyncpa [#allocation3], 0
    %9 = vsyncpa [#allocation6], 0
    %10 = vsyncpa [#allocation4], 0
    // Predicated region
    $region2: #{tpu_custom_call.1} parent=1 // pred_check
      _
    $region3: #{tpu_custom_call.1} parent=1 // pred_check_branch
      %12 = sbr.rel (0) target = $region5
    $region4: #{tpu_custom_call.1} parent=1 // pred_region
      %s14 = ssub.s32 16, 16
      %15 = vsyncadd [#allocation3], %s14
      %s17 = sshll.u32 [#allocation2], 4
      %s18 = int_to_ptr.vmem [resolvable:$true] %s17
      %20 = dma.hbm_to_vmem [thread:$0]  %s0, 16, %s18, [#allocation3]
    $region5: #{tpu_custom_call.1} parent=1 // pred_fallthru
      _
    // Predicated region
    $region6: #{tpu_custom_call.1} parent=1 // pred_check
      _
    $region7: #{tpu_custom_call.1} parent=1 // pred_check_branch
      %22 = sbr.rel (0) target = $region9
    $region8: #{tpu_custom_call.1} parent=1 // pred_region
      %s24 = ssub.s32 512, 512
      %25 = vsyncadd [#allocation6], %s24
      %s26 = sshll.u32 [#allocation5], 4
      %s27 = int_to_ptr.vmem [resolvable:$true] %s26
      %32 = dma.hbm_to_vmem [thread:$0]  %s1, 512, %s27, [#allocation6], 128, 128, 8
    $region9: #{tpu_custom_call.1} parent=1 // pred_fallthru
      _
    // Predicated region
    $region10: #{tpu_custom_call.1} parent=1 // pred_check
      _
    $region11: #{tpu_custom_call.1} parent=1 // pred_check_branch
      %34 = sbr.rel (0) target = $region13
    $region12: #{tpu_custom_call.1} parent=1 // pred_region
      %s36 = ssub.s32 256, 256
      %37 = vsyncadd [#allocation6], %s36
      %s38 = sshll.u32 [#allocation7], 4
      %s39 = int_to_ptr.vmem [resolvable:$true] %s38
      %44 = dma.hbm_to_vmem [thread:$0]  %s2, 256, %s39, [#allocation6], 128, 128, 8
    $region13: #{tpu_custom_call.1} parent=1 // pred_fallthru
      _
    // Predicated region
    $region14: #{tpu_custom_call.1} parent=1 // pred_check
      _
    $region15: #{tpu_custom_call.1} parent=1 // pred_check_branch
      %46 = sbr.rel (0) target = $region17
    $region16: #{tpu_custom_call.1} parent=1 // pred_region
      %47 = dma.done [#allocation3], 16
    $region17: #{tpu_custom_call.1} parent=1 // pred_fallthru
      _
    // Predicated region
    $region18: #{tpu_custom_call.1} parent=1 // pred_check
      _
    $region19: #{tpu_custom_call.1} parent=1 // pred_check_branch
      %49 = sbr.rel (0) target = $region21
    $region20: #{tpu_custom_call.1} parent=1 // pred_region
      %50 = dma.done [#allocation6], 512
    $region21: #{tpu_custom_call.1} parent=1 // pred_fallthru
      _
    // Predicated region
    $region22: #{tpu_custom_call.1} parent=1 // pred_check
      _
    $region23: #{tpu_custom_call.1} parent=1 // pred_check_branch
      %52 = sbr.rel (0) target = $region25
    $region24: #{tpu_custom_call.1} parent=1 // pred_region
      %53 = dma.done [#allocation6], 256
    $region25: #{tpu_custom_call.1} parent=1 // pred_fallthru
      _
    %v54 = vld [vmem:[#allocation2] sm:$0x1]
    %v55 = vld [vmem:[#allocation5] sm:$0xff]
    %v56 = vld [vmem:[#allocation5 + $0x8] sm:$0xff]
    %v57 = vld [vmem:[#allocation5 + $0x10] sm:$0xff]
    %v58 = vld [vmem:[#allocation5 + $0x18] sm:$0xff]
    %v59 = vld [vmem:[#allocation7] sm:$0xff]
    %v60 = vld [vmem:[#allocation7 + $0x8] sm:$0xff]
    %vm61 = vcmask 523264
    %v63 = vsel %vm61, %v54, 0
    %v66 = vsel %vm61, %v55, 0
    %v69 = vsel %vm61, %v56, 0
    %v72 = vsel %vm61, %v57, 0
    %v75 = vsel %vm61, %v58, 0
    %77 = vmatprep.subr.mxu0 0.0
    %78 = vmatpush1.xpose.msra.mxu0 %v66
    %79 = vmatprep.subr.mxu0 0.0
    %80 = vmatpush1.xpose.msra.mxu0 %v69
    %81 = vmatprep.subr.mxu0 0.0
    %82 = vmatpush1.xpose.msra.mxu0 %v72
    %83 = vmatprep.subr.mxu0 0.0
    %84 = vmatpush1.xpose.msra.mxu0 %v75
    %85 = vmatprep.subr.mxu0 0.0
    %86 = vmatpush1.xpose.msra.mxu0 0.0
    %87 = vmatprep.subr.mxu0 0.0
    %88 = vmatpush1.xpose.msra.mxu0 0.0
    %89 = vmatprep.subr.mxu0 0.0
    %90 = vmatpush1.xpose.msra.mxu0 0.0
    %91 = vmatprep.subr.mxu0 0.0
    %92 = vmatpush1.xpose.msra.mxu0 0.0
    %93 = vmatprep.subr.mxu0 0.0
    %94 = vmatpush1.xpose.msra.mxu0 0.0
    %95 = vmatprep.subr.mxu0 0.0
    %96 = vmatpush1.xpose.msra.mxu0 0.0
    %97 = vmatprep.subr.mxu0 0.0
    %98 = vmatpush1.xpose.msra.mxu0 0.0
    %99 = vmatprep.subr.mxu0 0.0
    %100 = vmatpush1.xpose.msra.mxu0 0.0
    %101 = vmatprep.subr.mxu0 0.0
    %102 = vmatpush1.xpose.msra.mxu0 0.0
    %103 = vmatprep.subr.mxu0 0.0
    %104 = vmatpush1.xpose.msra.mxu0 0.0
    %105 = vmatprep.subr.mxu0 0.0
    %106 = vmatpush1.xpose.msra.mxu0 0.0
    %107 = vmatprep.subr.mxu0 0.0
    %108 = vmatpush1.xpose.msra.mxu0 0.0
    %109 = vmatprep.subr.mxu0 0.0
    %110 = vmatpush1.xpose.msra.mxu0 0.0
    %111 = vmatprep.subr.mxu0 0.0
    %112 = vmatpush1.xpose.msra.mxu0 0.0
    %113 = vmatprep.subr.mxu0 0.0
    %114 = vmatpush1.xpose.msra.mxu0 0.0
    %115 = vmatprep.subr.mxu0 0.0
    %116 = vmatpush1.xpose.msra.mxu0 0.0
    %117 = vmatprep.subr.mxu0 0.0
    %118 = vmatpush1.xpose.msra.mxu0 0.0
    %119 = vmatprep.subr.mxu0 0.0
    %120 = vmatpush1.xpose.msra.mxu0 0.0
    %121 = vmatprep.subr.mxu0 0.0
    %122 = vmatpush1.xpose.msra.mxu0 0.0
    %123 = vmatprep.subr.mxu0 0.0
    %124 = vmatpush1.xpose.msra.mxu0 0.0
    %125 = vmatprep.subr.mxu0 0.0
    %126 = vmatpush1.xpose.msra.mxu0 0.0
    %127 = vmatprep.subr.mxu0 0.0
    %128 = vmatpush1.xpose.msra.mxu0 0.0
    %129 = vmatprep.subr.mxu0 0.0
    %130 = vmatpush1.xpose.msra.mxu0 0.0
    %131 = vmatprep.subr.mxu0 0.0
    %132 = vmatpush1.xpose.msra.mxu0 0.0
    %133 = vmatprep.subr.mxu0 0.0
    %134 = vmatpush1.xpose.msra.mxu0 0.0
    %135 = vmatprep.subr.mxu0 0.0
    %136 = vmatpush1.xpose.msra.mxu0 0.0
    %137 = vmatprep.subr.mxu0 0.0
    %138 = vmatpush1.xpose.msra.mxu0 0.0
    %139 = vmatprep.subr.mxu0 0.0
    %140 = vmatpush1.xpose.msra.mxu0 0.0
    %141 = vmatprep.mubr.f32.mxu0 0.0
    %142 = vmatmul.mubr.f32.gmra.mrb[0].mxu0 %v63
    %v143 = vpop.f32.mrb[0].mxu0
    %v144 = vadd.f32 0.0, %v143
    %v145 = vpop.f32.mrb[0].mxu0
    %146 = vdwg.mxu0
    %v147 = vsub.f32 0.0, %v144
    %v148 = vmul.f32 %v147, 1.442695
    %v149 = vpow.pop %v148
    %v150 = vadd.f32 %v149, 1.0
    %v151 = vrcp.pop %v150
    %vm152 = vcmask 261120
    %v154 = vsel %vm152, %v151, 0
    %v157 = vsel %vm152, %v59, 0
    %v160 = vsel %vm152, %v60, 0
    %162 = vmatprep.subr.mxu0 0.0
    %163 = vmatpush1.xpose.msra.mxu0 %v157
    %164 = vmatprep.subr.mxu0 0.0
    %165 = vmatpush1.xpose.msra.mxu0 %v160
    %166 = vmatprep.subr.mxu0 0.0
    %167 = vmatpush1.xpose.msra.mxu0 0.0
    %168 = vmatprep.subr.mxu0 0.0
    %169 = vmatpush1.xpose.msra.mxu0 0.0
    %170 = vmatprep.subr.mxu0 0.0
    %171 = vmatpush1.xpose.msra.mxu0 0.0
    %172 = vmatprep.subr.mxu0 0.0
    %173 = vmatpush1.xpose.msra.mxu0 0.0
    %174 = vmatprep.subr.mxu0 0.0
    %175 = vmatpush1.xpose.msra.mxu0 0.0
    %176 = vmatprep.subr.mxu0 0.0
    %177 = vmatpush1.xpose.msra.mxu0 0.0
    %178 = vmatprep.subr.mxu0 0.0
    %179 = vmatpush1.xpose.msra.mxu0 0.0
    %180 = vmatprep.subr.mxu0 0.0
    %181 = vmatpush1.xpose.msra.mxu0 0.0
    %182 = vmatprep.subr.mxu0 0.0
    %183 = vmatpush1.xpose.msra.mxu0 0.0
    %184 = vmatprep.subr.mxu0 0.0
    %185 = vmatpush1.xpose.msra.mxu0 0.0
    %186 = vmatprep.subr.mxu0 0.0
    %187 = vmatpush1.xpose.msra.mxu0 0.0
    %188 = vmatprep.subr.mxu0 0.0
    %189 = vmatpush1.xpose.msra.mxu0 0.0
    %190 = vmatprep.subr.mxu0 0.0
    %191 = vmatpush1.xpose.msra.mxu0 0.0
    %192 = vmatprep.subr.mxu0 0.0
    %193 = vmatpush1.xpose.msra.mxu0 0.0
    %194 = vmatprep.subr.mxu0 0.0
    %195 = vmatpush1.xpose.msra.mxu0 0.0
    %196 = vmatprep.subr.mxu0 0.0
    %197 = vmatpush1.xpose.msra.mxu0 0.0
    %198 = vmatprep.subr.mxu0 0.0
    %199 = vmatpush1.xpose.msra.mxu0 0.0
    %200 = vmatprep.subr.mxu0 0.0
    %201 = vmatpush1.xpose.msra.mxu0 0.0
    %202 = vmatprep.subr.mxu0 0.0
    %203 = vmatpush1.xpose.msra.mxu0 0.0
    %204 = vmatprep.subr.mxu0 0.0
    %205 = vmatpush1.xpose.msra.mxu0 0.0
    %206 = vmatprep.subr.mxu0 0.0
    %207 = vmatpush1.xpose.msra.mxu0 0.0
    %208 = vmatprep.subr.mxu0 0.0
    %209 = vmatpush1.xpose.msra.mxu0 0.0
    %210 = vmatprep.subr.mxu0 0.0
    %211 = vmatpush1.xpose.msra.mxu0 0.0
    %212 = vmatprep.subr.mxu0 0.0
    %213 = vmatpush1.xpose.msra.mxu0 0.0
    %214 = vmatprep.subr.mxu0 0.0
    %215 = vmatpush1.xpose.msra.mxu0 0.0
    %216 = vmatprep.subr.mxu0 0.0
    %217 = vmatpush1.xpose.msra.mxu0 0.0
    %218 = vmatprep.subr.mxu0 0.0
    %219 = vmatpush1.xpose.msra.mxu0 0.0
    %220 = vmatprep.subr.mxu0 0.0
    %221 = vmatpush1.xpose.msra.mxu0 0.0
    %222 = vmatprep.subr.mxu0 0.0
    %223 = vmatpush1.xpose.msra.mxu0 0.0
    %224 = vmatprep.subr.mxu0 0.0
    %225 = vmatpush1.xpose.msra.mxu0 0.0
    %226 = vmatprep.mubr.f32.mxu0 0.0
    %227 = vmatmul.mubr.f32.gmra.mrb[0].mxu0 %v154
    %v228 = vpop.f32.mrb[0].mxu0
    %v229 = vadd.f32 0.0, %v228
    %v230 = vpop.f32.mrb[0].mxu0
    %231 = vdwg.mxu0
    %v232 = vsub.f32 0.0, %v229
    %v233 = vmul.f32 %v232, 1.442695
    %v234 = vpow.pop %v233
    %v235 = vadd.f32 %v234, 1.0
    %v236 = vrcp.pop %v235
    %vm237 = vcmask 122880
    %238 = vst.msk [vmem:[#allocation8] sm:$0x1] %vm237, %v236
    // Predicated region
    $region26: #{tpu_custom_call.1} parent=1 // pred_check
      _
    $region27: #{tpu_custom_call.1} parent=1 // pred_check_branch
      %240 = sbr.rel (0) target = $region29
    $region28: #{tpu_custom_call.1} parent=1 // pred_region
      %s242 = ssub.s32 16, 16
      %243 = vsyncadd [#allocation4], %s242
      %s245 = sshll.u32 [#allocation8], 4
      %s246 = int_to_ptr.vmem [resolvable:$true] %s245
      %248 = dma.vmem_to_hbm [thread:$0]  %s246, 16, %s3, [#allocation4]
    $region29: #{tpu_custom_call.1} parent=1 // pred_fallthru
      _
    // Predicated region
    $region30: #{tpu_custom_call.1} parent=1 // pred_check
      _
    $region31: #{tpu_custom_call.1} parent=1 // pred_check_branch
      %250 = sbr.rel (0) target = $region33
    $region32: #{tpu_custom_call.1} parent=1 // pred_region
      %251 = dma.done [#allocation4], 16
    $region33: #{tpu_custom_call.1} parent=1 // pred_fallthru
      _
    %252 = vsyncpa [#allocation3], 1
    %253 = vsyncpa [#allocation6], 1
    %254 = vsyncpa [#allocation4], 1

</llo_original>
